<compile_context>
chip_gen: v6e
topology: v6e:2x2x1
jax: 0.10.0
libtpu: 0.0.40
codegen_flags: <defaults>
</compile_context>

<pallas_src>
import jax
import jax.numpy as jnp
from jax.experimental import pallas as pl
from jax.experimental.pallas import tpu as pltpu


# ----------------------------- kernels ------------------------------------


def _square_kernel(x_ref, o_ref):
    x = x_ref[...]
    o_ref[...] = x * x


def _log_kernel(x_ref, o_ref):
    # torch.log(torch.clamp(input, min=1e-6)); compute in f32, cast on store.
    x = x_ref[...].astype(jnp.float32)
    o_ref[...] = jnp.log(jnp.maximum(x, 1e-6)).astype(o_ref.dtype)


def _square_log_kernel(x_ref, o_ref):
    # Fused square -> log(clamp(., 1e-6)) for adjacent call sites.
    x = x_ref[...].astype(jnp.float32)
    o_ref[...] = jnp.log(jnp.maximum(x * x, 1e-6)).astype(o_ref.dtype)


_KERNELS = {
    "square": _square_kernel,
    "log": _log_kernel,
    "square_log": _square_log_kernel,
}


def _jnp_ref(x, act_type):
    """Plain-jnp fallback (tiny tails / inputs smaller than one slab row)."""
    if act_type == "square":
        return x * x
    if act_type == "log":
        return jnp.log(jnp.maximum(x.astype(jnp.float32), 1e-6)).astype(x.dtype)
    if act_type == "square_log":
        xf = x.astype(jnp.float32)
        return jnp.log(jnp.maximum(xf * xf, 1e-6)).astype(x.dtype)
    raise Exception("Invalid type !")


def _round_up(a, b):
    return ((a + b - 1) // b) * b


# ----------------------------- wrapper -------------------------------------


def activation(x, act_type: str, *, lanes: int = 512, max_block_rows: int = 1024):
    """Apply the ShallowConvNet activation elementwise via a Pallas kernel."""
    if act_type not in _KERNELS:
        raise Exception("Invalid type !")
    kernel = _KERNELS[act_type]

    orig_shape = x.shape
    orig_dtype = x.dtype
    n = x.size
    if n == 0:
        return x

    x_flat = jnp.ravel(x)

    # Divisible bulk goes through Pallas as a (rows, lanes) lane-dense slab;
    # the sub-row tail (< `lanes` elements) is done with plain jnp.
    n_main = (n // lanes) * lanes
    tail = n - n_main

    if n_main == 0:
        # Smaller than one slab row: launch overhead dominates, skip Pallas.
        return _jnp_ref(x_flat, act_type).reshape(orig_shape)

    rows = n_main // lanes
    x2d = (x_flat[:n_main] if tail else x_flat).reshape(rows, lanes)

    # Large lane-dense block (~2 MiB f32 at (1024, 512)); ragged last block is
    # masked by Pallas, so no padding copy is needed.
    block_rows = min(max_block_rows, _round_up(rows, 8))
    grid = (pl.cdiv(rows, block_rows),)

    out2d = pl.pallas_call(
        kernel,
        out_shape=jax.ShapeDtypeStruct((rows, lanes), orig_dtype),
        grid_spec=pltpu.PrefetchScalarGridSpec(
            num_scalar_prefetch=0,
            grid=grid,
            in_specs=[pl.BlockSpec((block_rows, lanes), lambda i: (i, 0))],
            out_specs=pl.BlockSpec((block_rows, lanes), lambda i: (i, 0)),
        ),
        compiler_params=pltpu.CompilerParams(
            dimension_semantics=("parallel",)
        ),
    )(x2d)

    out_flat = out2d.reshape(-1)
    if tail:
        tail_out = _jnp_ref(x_flat[n_main:], act_type)
        out_flat = jnp.concatenate([out_flat, tail_out], axis=0)
    return out_flat.reshape(orig_shape)


# ------------------------------- test ---------------------------------------


if __name__ == "__main__":
    key = jax.random.PRNGKey(0)
    # NCHW conv-style input consistent with ShallowConvNet usage.
    x = jax.random.normal(key, (2, 4, 16, 16), dtype=jnp.float32)

    # square activation
    y_sq = activation(x, "square")
    jax.block_until_ready(y_sq)
    ref_sq = x * x
    assert jnp.allclose(y_sq, ref_sq, atol=1e-6), "square mismatch"

    # log activation (applied to squared values, as in ShallowConvNet pipeline)
    y_log = activation(y_sq, "log")
    jax.block_until_ready(y_log)
    ref_log = jnp.log(jnp.maximum(y_sq, 1e-6))
    assert jnp.allclose(y_log, ref_log, atol=1e-5), "log mismatch"

    # fused square->log variant (single HBM pass when the two are adjacent)
    y_fused = activation(x, "square_log")
    jax.block_until_ready(y_fused)
    assert jnp.allclose(y_fused, ref_log, atol=1e-5), "fused mismatch"

    # non-divisible size exercises the ragged / tail path
    x_odd = jax.random.normal(key, (3, 5, 7, 11), dtype=jnp.float32)  # 1155 elems
    y_odd = activation(x_odd, "square")
    jax.block_until_ready(y_odd)
    assert jnp.allclose(y_odd, x_odd * x_odd, atol=1e-6), "ragged square mismatch"

    print("KERNEL_OK")
</pallas_src>

<mosaic_0001>
module attributes {stable_mosaic.version = 11 : i64} {
  func.func @_square_kernel(%arg0: i32, %arg1: memref<8x512xf32, #tpu.memory_space<vmem>>, %arg2: memref<8x512xf32, #tpu.memory_space<vmem>>) attributes {dimension_semantics = [#tpu.dimension_semantics<parallel>], iteration_bounds = array<i64: 1>, scalar_prefetch = 0 : i64, scratch_operands = 0 : i64, tpu.core_type = #tpu.core_type<tc>, window_params = [{transform_indices = @transform_0, window_bounds = array<i64: 8, 512>}, {transform_indices = @transform_1, window_bounds = array<i64: 8, 512>}]} {
    %c0 = arith.constant 0 : index
    %c0_0 = arith.constant 0 : index
    %0 = vector.load %arg1[%c0, %c0_0] : memref<8x512xf32, #tpu.memory_space<vmem>>, vector<8x512xf32>
    %1 = arith.mulf %0, %0 : vector<8x512xf32>
    %c0_1 = arith.constant 0 : index
    %c0_2 = arith.constant 0 : index
    %2 = vector.load %arg2[%c0_1, %c0_2] : memref<8x512xf32, #tpu.memory_space<vmem>>, vector<8x512xf32>
    tpu.vector_store %arg2[%c0_1, %c0_2], %1 {strides = array<i32>} : memref<8x512xf32, #tpu.memory_space<vmem>>, vector<8x512xf32>,
    return
  }
  func.func @transform_0(%arg0: i32) -> (i32, i32) {
    %c0_i32 = arith.constant 0 : i32
    %c0_i32_0 = arith.constant 0 : i32
    return %arg0, %c0_i32 : i32, i32
  }
  func.func @transform_1(%arg0: i32) -> (i32, i32) {
    %c0_i32 = arith.constant 0 : i32
    %c0_i32_0 = arith.constant 0 : i32
    return %arg0, %c0_i32 : i32, i32
  }
}

</mosaic_0001>

<llo_original>
// kernel: tpu_custom_call.1
$region0: #{tpu_custom_call.1}
  #allocation0 [shape = 'u32[]', space=smem, size = 0x4, offset = 0x4, fixed_abs, tag = 'smem constant byte address 0x4 - core index']
  #allocation1 [shape = 'u32[144,128]{1,0:T(1,128)}', space=vmem, size = 0x12000, scoped, tag = 'internal scratch']
  %s0 = inlined_call_operand.hbm [shape: f32[4,512], index: 0, kind: input, shape index: {}]
  %s1 = inlined_call_operand.hbm [shape: f32[4,512], index: 1, kind: output, shape index: {}]
  %s2 = sld [smem:[#allocation0]]
  $region18: #{tpu_custom_call.1} parent=0
    _
  %s4 = ssub.s32 1, %s2
  %s5 = scalar_select 0, %s4, %s2
  $region1: #{tpu_custom_call.1} parent=0
    #allocation2 [shape = 'u8[16384]{0}', space=vmem, size = 0x4000, scoped, tag = 'input window, operand 0, single buffered']
    #allocation3 [shape = 's32[1]{0}', space=sflag, size = 0x4, scoped, tag = 'scoped memory for tpu_custom_call.1']
    #allocation4 [shape = 's32[1]{0}', space=sflag, size = 0x4, scoped, tag = 'scoped memory for tpu_custom_call.1']
    #allocation5 [shape = 'u8[16384]{0}', space=vmem, size = 0x4000, scoped, tag = 'output window, operand 0, single buffered']
    %6 = vsyncpa [#allocation3], 0
    %7 = vsyncpa [#allocation4], 0
    // Predicated region
    $region2: #{tpu_custom_call.1} parent=1 // pred_check
      _
    $region3: #{tpu_custom_call.1} parent=1 // pred_check_branch
      %9 = sbr.rel (0) target = $region5
    $region4: #{tpu_custom_call.1} parent=1 // pred_region
      %s11 = ssub.s32 512, 256
      %12 = vsyncadd [#allocation3], %s11
      %s13 = sshll.u32 [#allocation2], 4
      %s14 = int_to_ptr.vmem [resolvable:$true] %s13
      %19 = dma.hbm_to_vmem [thread:$0]  %s0, 256, %s14, [#allocation3], 256, 256, 16
    $region5: #{tpu_custom_call.1} parent=1 // pred_fallthru
      _
    // Predicated region
    $region6: #{tpu_custom_call.1} parent=1 // pred_check
      _
    $region7: #{tpu_custom_call.1} parent=1 // pred_check_branch
      %21 = sbr.rel (0) target = $region9
    $region8: #{tpu_custom_call.1} parent=1 // pred_region
      %22 = dma.done [#allocation3], 512
    $region9: #{tpu_custom_call.1} parent=1 // pred_fallthru
      _
    %v23 = vld [vmem:[#allocation2] sm:$0xff]
    %v24 = vld [vmem:[#allocation2 + $0x8] sm:$0xff]
    %v25 = vld [vmem:[#allocation2 + $0x10] sm:$0xff]
    %v26 = vld [vmem:[#allocation2 + $0x18] sm:$0xff]
    %v27 = vmul.f32 %v23, %v23
    %v28 = vmul.f32 %v24, %v24
    %v29 = vmul.f32 %v25, %v25
    %v30 = vmul.f32 %v26, %v26
    %31 = vst [vmem:[#allocation5] sm:$0xff] %v27
    %32 = vst [vmem:[#allocation5 + $0x8] sm:$0xff] %v28
    %33 = vst [vmem:[#allocation5 + $0x10] sm:$0xff] %v29
    %34 = vst [vmem:[#allocation5 + $0x18] sm:$0xff] %v30
    // Predicated region
    $region10: #{tpu_custom_call.1} parent=1 // pred_check
      _
    $region11: #{tpu_custom_call.1} parent=1 // pred_check_branch
      %36 = sbr.rel (0) target = $region13
    $region12: #{tpu_custom_call.1} parent=1 // pred_region
      %s38 = ssub.s32 512, 256
      %39 = vsyncadd [#allocation4], %s38
      %s40 = sshll.u32 [#allocation5], 4
      %s41 = int_to_ptr.vmem [resolvable:$true] %s40
      %46 = dma.vmem_to_hbm [thread:$0]  %s41, 256, %s1, [#allocation4], 256, 256, 16
    $region13: #{tpu_custom_call.1} parent=1 // pred_fallthru
      _
    // Predicated region
    $region14: #{tpu_custom_call.1} parent=1 // pred_check
      _
    $region15: #{tpu_custom_call.1} parent=1 // pred_check_branch
      %48 = sbr.rel (0) target = $region17
    $region16: #{tpu_custom_call.1} parent=1 // pred_region
      %49 = dma.done [#allocation4], 512
    $region17: #{tpu_custom_call.1} parent=1 // pred_fallthru
      _
    %50 = vsyncpa [#allocation3], 1
    %51 = vsyncpa [#allocation4], 1

</llo_original>
